<compile_context>
chip_gen: v7x
topology: tpu7x:2x2x1
jax: 0.10.0
libtpu: 0.0.40
codegen_flags: <defaults>
</compile_context>

<pallas_src>
import jax
import jax.numpy as jnp
from jax.experimental import pallas as pl
from jax.experimental.pallas import tpu as pltpu


def _dma_clone_kernel(x_hbm, o_hbm, sem):
    # Single direct HBM->HBM copy: no VMEM staging, no vector loads/stores.
    cp = pltpu.make_async_copy(x_hbm, o_hbm, sem)
    cp.start()
    cp.wait()


def _pallas_clone(x: jax.Array) -> jax.Array:
    """Independent copy of `x` via one HBM->HBM DMA (no VMEM staging)."""
    nbytes = x.size * jnp.dtype(x.dtype).itemsize
    cost = pl.CostEstimate(flops=0, transcendentals=0, bytes_accessed=2 * nbytes)
    return pl.pallas_call(
        _dma_clone_kernel,
        out_shape=jax.ShapeDtypeStruct(x.shape, x.dtype),
        in_specs=[pl.BlockSpec(memory_space=pl.ANY)],
        out_specs=pl.BlockSpec(memory_space=pl.ANY),
        scratch_shapes=[pltpu.SemaphoreType.DMA],
        cost_estimate=cost,
    )(x)


class SamplingIterator:
    """JAX/Pallas port of deepinv.sampling.SamplingIterator (base class)."""

    def __init__(self, algo_params: dict, copy_state: bool = False, **kwargs):
        # No learnable parameters in the base class; algo_params is just stored.
        self.algo_params = dict(algo_params)
        # copy_state=False (default): zero-cost state init, exactly like the
        #   PyTorch reference ({"x": x_init}, no data movement).
        # copy_state=True: return an *independent* buffer (clone semantics) so
        #   future per-step kernels can update the state in place.
        self._copy_state = copy_state

    def initialize_latent_variables(self, x_init, y=None, physics=None,
                                    cur_data_fidelity=None, cur_prior=None):
        # State initialization: X_0 = {"x": x_init}.
        if self._copy_state:
            return {"x": _pallas_clone(x_init)}
        # Zero-cost path: no HBM traffic, matches the reference exactly.
        return {"x": x_init}

    def forward(self, X, y=None, physics=None, cur_data_fidelity=None,
                cur_prior=None, iteration: int = 0, *args, **kwargs):
        # TODO(synk): base-class forward raises NotImplementedError in PyTorch;
        # there is no compute to translate. Subclasses define the MCMC step.
        raise NotImplementedError(
            "Subclasses of SamplingIterator must implement the forward method"
        )

    __call__ = forward


if __name__ == "__main__":
    key = jax.random.PRNGKey(0)
    kx, ky = jax.random.split(key)

    # Small shapes consistent with an imaging sampler: batch=2, channels=4,
    # spatial 16x16 (NCHW); measurements y same shape.
    x_init = jax.random.normal(kx, (2, 4, 16, 16), dtype=jnp.float32)
    y = jax.random.normal(ky, (2, 4, 16, 16), dtype=jnp.float32)

    # Default: zero-cost state initialization (no copy at all).
    it = SamplingIterator(algo_params={"step_size": 0.1})
    state = it.initialize_latent_variables(x_init, y)
    assert state["x"] is x_init

    # Optional clone path: one HBM->HBM DMA, independent output buffer.
    it_copy = SamplingIterator(algo_params={"step_size": 0.1}, copy_state=True)
    state_copy = it_copy.initialize_latent_variables(x_init, y)
    out = jax.block_until_ready(state_copy["x"])

    assert out.shape == x_init.shape and out.dtype == x_init.dtype
    # x_init was NOT donated/aliased, so it is still readable here.
    assert bool(jnp.allclose(out, x_init))

    # forward must raise, matching the reference semantics.
    try:
        it.forward(state, y, None, None, None, 0)
        raise AssertionError("forward should raise NotImplementedError")
    except NotImplementedError:
        pass

    print("KERNEL_OK")
</pallas_src>

<mosaic_0001>
module attributes {stable_mosaic.version = 11 : i64} {
  func.func @_dma_clone_kernel(%arg0: memref<2x4x16x16xf32, #tpu.memory_space<any>>, %arg1: memref<2x4x16x16xf32, #tpu.memory_space<any>>, %arg2: memref<!tpu.dma_semaphore, #tpu.memory_space<semaphore_mem>>) attributes {dimension_semantics = [], scalar_prefetch = 0 : i64, scratch_operands = 1 : i64, tpu.core_type = #tpu.core_type<tc>} {
    tpu.enqueue_dma source(%arg0 : memref<2x4x16x16xf32, #tpu.memory_space<any>>) target(%arg1 : memref<2x4x16x16xf32, #tpu.memory_space<any>>) target_semaphore(%arg2 : memref<!tpu.dma_semaphore, #tpu.memory_space<semaphore_mem>>)
    tpu.wait_dma2 semaphore(%arg2 : memref<!tpu.dma_semaphore, #tpu.memory_space<semaphore_mem>>) src(%arg0 : memref<2x4x16x16xf32, #tpu.memory_space<any>>) dst(%arg1 : memref<2x4x16x16xf32, #tpu.memory_space<any>>)
    return
  }
}

</mosaic_0001>

<llo_original>
// kernel: tpu_custom_call.1
$region0: #{tpu_custom_call.1}
  #allocation0 [shape = 'u32[]', space=smem, size = 0x4, offset = 0x4, fixed_abs, tag = 'smem constant byte address 0x4 - core index']
  #allocation1 [shape = 'u32[144,128]{1,0:T(1,128)}', space=vmem, size = 0x12000, scoped, tag = 'internal scratch']
  #allocation2 [shape = 's32[1]{0}', space=sflag, size = 0x4, scoped, tag = 'scratch operand']
  #allocation3 [shape = 's32[]', space=sflag, size = 0x4, offset = 0, fixed_abs, tag = 'sflag constant byte address 0x0 - dummy sync flag']
  #allocation4 [shape = 'u32[0]{0}', space=smem, size = 0, offset = 0, fixed_abs, tag = 'smem constant byte address 0x0 - null']
  %s0 = inlined_call_operand.hbm [shape: f32[2,4,16,16], index: 0, kind: input, shape index: {}]
  %s1 = inlined_call_operand.hbm [shape: f32[2,4,16,16], index: 1, kind: output, shape index: {}]
  %s2 = sld [smem:[#allocation0]]
  $region2: #{tpu_custom_call.1} parent=0
    _
  %s4 = ssub.s32 1, %s2
  %s5 = scalar_select 0, %s4, %s2
  %s7 = sshll.u32 1, 14
  %s8 = sxor.u32 4294967295, %s7
  %s11 = sshll.u32 3, 24
  %s12 = sxor.u32 4294967295, %s11
  %s13 = sand.u32 0, %s12
  %s15 = sor.u32 %s13, 0
  %18 = dma.general %s0, 2048, %s1, [#allocation2], [#allocation3], [#allocation4], %s15, 0
  %s19 = smul.u32 2, 4
  %s20 = smul.u32 %s19, 16
  %s21 = smul.u32 %s20, 1
  %s22 = sshll.u32 %s21, 4
  %23 = dma.done [#allocation2], %s22
  %24 = vsyncmov [#allocation2]
  %s25 = vpop.sfrf %24
  %p26 = scmp.eq.s32.totalorder %s25, 0
  %p27 = pneg %p26
  %29 = shalt.err (%p27)

</llo_original>
